<compile_context>
chip_gen: v6e
topology: v6e:2x2x1
jax: 0.10.0
libtpu: 0.0.40
codegen_flags: <defaults>
</compile_context>

<pallas_src>
import jax
import jax.numpy as jnp
from jax.experimental import pallas as pl
from jax.experimental.pallas import tpu as pltpu


def _round_up(a, b):
    return ((a + b - 1) // b) * b


def _patch_embed_kernel(x_ref, w_ref, b_ref, o_ref):
    # x_ref: (TM, K) bf16 patch rows   w_ref: (K, E_pad) bf16 (VMEM-resident)
    # b_ref: (1, E_pad) f32            o_ref: (TM, E_pad) in output dtype
    acc = jnp.dot(x_ref[...], w_ref[...], preferred_element_type=jnp.float32)
    o_ref[...] = (acc + b_ref[...]).astype(o_ref.dtype)


def patch_embedding(x, weight, bias, patch_size, *, tm=512,
                    compute_dtype=jnp.bfloat16):
    """x: (B, C, H, W) NCHW. weight: (E, C, P, P). bias: (E,).

    Returns (B, H//P, W//P, E).
    """
    B, C, H, W = x.shape
    E = weight.shape[0]
    P = patch_size
    Hp, Wp = H // P, W // P
    K = C * P * P
    M = B * Hp * Wp

    # Patch extraction / flattening (row order C,P,P matches the weight reshape).
    # TODO(synk): fuse this relayout into the kernel's DMA (BlockSpec over the
    # NCHW array, one (1,C,P,W) row of patches per grid step) to kill the extra
    # HBM round-trip for very large activations; for now XLA fuses it.
    patches = x.reshape(B, C, Hp, P, Wp, P)
    patches = patches.transpose(0, 2, 4, 1, 3, 5)      # (B, Hp, Wp, C, P, P)
    patches = patches.reshape(M, K)                     # (M, K)

    w2 = weight.reshape(E, K).T                         # (K, E)
    b2 = bias.reshape(1, E).astype(jnp.float32)         # (1, E)

    # Lane-dense output: pad E to a multiple of 128. Zero padding keeps the
    # math exact; the wrapper slices back to E below.
    E_pad = _round_up(E, 128)
    if E_pad != E:
        w2 = jnp.pad(w2, ((0, 0), (0, E_pad - E)))
        b2 = jnp.pad(b2, ((0, 0), (0, E_pad - E)))

    # Tile M (multiple of 8 for the sublane rule); pad M so the grid is exact.
    tm = max(8, min(tm, _round_up(M, 8)))
    tm = _round_up(tm, 8)
    M_pad = _round_up(M, tm)
    if M_pad != M:
        patches = jnp.pad(patches, ((0, M_pad - M), (0, 0)))

    # bf16 operands for the MXU; accumulation stays f32 inside the kernel.
    patches_c = patches.astype(compute_dtype)
    w2_c = w2.astype(compute_dtype)

    grid = (M_pad // tm,)

    cost = pl.CostEstimate(
        flops=2 * M_pad * K * E_pad,
        bytes_accessed=(patches_c.size * patches_c.dtype.itemsize
                        + w2_c.size * w2_c.dtype.itemsize
                        + b2.size * b2.dtype.itemsize
                        + M_pad * E_pad * x.dtype.itemsize),
        transcendentals=0,
    )

    out = pl.pallas_call(
        _patch_embed_kernel,
        out_shape=jax.ShapeDtypeStruct((M_pad, E_pad), x.dtype),
        grid=grid,
        in_specs=[
            pl.BlockSpec((tm, K), lambda i: (i, 0)),       # streamed patch rows
            pl.BlockSpec((K, E_pad), lambda i: (0, 0)),    # weight: resident
            pl.BlockSpec((1, E_pad), lambda i: (0, 0)),    # bias:   resident
        ],
        out_specs=pl.BlockSpec((tm, E_pad), lambda i: (i, 0)),
        compiler_params=pltpu.CompilerParams(
            dimension_semantics=("parallel",),             # megacore on v7x
        ),
        cost_estimate=cost,
    )(patches_c, w2_c, b2)

    out = out[:M, :E]
    return out.reshape(B, Hp, Wp, E)


if __name__ == "__main__":
    # Small shapes consistent with the module: in_channels=4, patch_size=8, emb_size=32.
    B, C, H, W = 2, 4, 16, 16
    P, E = 8, 32

    key = jax.random.PRNGKey(0)
    kx, kw, kb = jax.random.split(key, 3)

    x = jax.random.normal(kx, (B, C, H, W), dtype=jnp.float32)
    weight = jax.random.normal(kw, (E, C, P, P), dtype=jnp.float32) * 0.02
    bias = jax.random.normal(kb, (E,), dtype=jnp.float32) * 0.02

    out = patch_embedding(x, weight, bias, P)
    out = jax.block_until_ready(out)

    Hp, Wp = H // P, W // P
    assert out.shape == (B, Hp, Wp, E)

    # Reference mimicking the kernel's bf16-input / f32-accumulate matmul.
    patches = x.reshape(B, C, Hp, P, Wp, P).transpose(0, 2, 4, 1, 3, 5)
    patches = patches.reshape(B * Hp * Wp, C * P * P)
    pbf = patches.astype(jnp.bfloat16)
    wbf = weight.reshape(E, -1).T.astype(jnp.bfloat16)
    ref = jnp.dot(pbf, wbf, preferred_element_type=jnp.float32) + bias
    ref = ref.reshape(B, Hp, Wp, E).astype(x.dtype)
    assert jnp.allclose(out, ref, atol=1e-3, rtol=1e-3)

    # Loose check against the exact f32 conv-as-matmul reference (bf16 rounding).
    ref_f32 = (patches @ weight.reshape(E, -1).T + bias).reshape(B, Hp, Wp, E)
    assert jnp.allclose(out, ref_f32, atol=2e-2, rtol=2e-2)

    print("KERNEL_OK")
</pallas_src>

<mosaic_0001>
module attributes {stable_mosaic.version = 11 : i64} {
  func.func @_patch_embed_kernel(%arg0: i32, %arg1: memref<8x256xbf16, #tpu.memory_space<vmem>>, %arg2: memref<256x128xbf16, #tpu.memory_space<vmem>>, %arg3: memref<1x128xf32, #tpu.memory_space<vmem>>, %arg4: memref<8x128xf32, #tpu.memory_space<vmem>>) attributes {dimension_semantics = [#tpu.dimension_semantics<parallel>], iteration_bounds = array<i64: 1>, scalar_prefetch = 0 : i64, scratch_operands = 0 : i64, tpu.core_type = #tpu.core_type<tc>, window_params = [{transform_indices = @transform_0, window_bounds = array<i64: 8, 256>}, {pipeline_mode = #tpu.pipeline_mode<synchronous>, transform_indices = @transform_1, window_bounds = array<i64: 256, 128>}, {pipeline_mode = #tpu.pipeline_mode<synchronous>, transform_indices = @transform_2, window_bounds = array<i64: 1, 128>}, {transform_indices = @transform_3, window_bounds = array<i64: 8, 128>}]} {
    %c0 = arith.constant 0 : index
    %c0_0 = arith.constant 0 : index
    %0 = vector.load %arg1[%c0, %c0_0] : memref<8x256xbf16, #tpu.memory_space<vmem>>, vector<8x256xbf16>
    %c0_1 = arith.constant 0 : index
    %c0_2 = arith.constant 0 : index
    %1 = vector.load %arg2[%c0_1, %c0_2] : memref<256x128xbf16, #tpu.memory_space<vmem>>, vector<256x128xbf16>
    %cst = arith.constant dense<0.000000e+00> : vector<8x128xf32>
    %2 = tpu.matmul %0, %1, %cst {dimension_numbers = #tpu.dot_dimension_numbers<[1], [0], [0], [1], [0, 0, 1, 1], [], []>} : vector<8x256xbf16>, vector<256x128xbf16>, vector<8x128xf32> -> vector<8x128xf32>
    %c0_3 = arith.constant 0 : index
    %c0_4 = arith.constant 0 : index
    %3 = vector.load %arg3[%c0_3, %c0_4] : memref<1x128xf32, #tpu.memory_space<vmem>>, vector<1x128xf32>
    %4 = vector.broadcast %3 : vector<1x128xf32> to vector<8x128xf32>
    %5 = arith.addf %2, %4 : vector<8x128xf32>
    %c0_5 = arith.constant 0 : index
    %c0_6 = arith.constant 0 : index
    %6 = vector.load %arg4[%c0_5, %c0_6] : memref<8x128xf32, #tpu.memory_space<vmem>>, vector<8x128xf32>
    tpu.vector_store %arg4[%c0_5, %c0_6], %5 {strides = array<i32>} : memref<8x128xf32, #tpu.memory_space<vmem>>, vector<8x128xf32>,
    return
  }
  func.func @transform_0(%arg0: i32) -> (i32, i32) {
    %c0_i32 = arith.constant 0 : i32
    %c0_i32_0 = arith.constant 0 : i32
    return %arg0, %c0_i32 : i32, i32
  }
  func.func @transform_1(%arg0: i32) -> (i32, i32) {
    %c0_i32 = arith.constant 0 : i32
    %c0_i32_0 = arith.constant 0 : i32
    %c0_i32_1 = arith.constant 0 : i32
    return %c0_i32, %c0_i32_0 : i32, i32
  }
  func.func @transform_2(%arg0: i32) -> (i32, i32) {
    %c0_i32 = arith.constant 0 : i32
    %c0_i32_0 = arith.constant 0 : i32
    %c0_i32_1 = arith.constant 0 : i32
    return %c0_i32, %c0_i32_0 : i32, i32
  }
  func.func @transform_3(%arg0: i32) -> (i32, i32) {
    %c0_i32 = arith.constant 0 : i32
    %c0_i32_0 = arith.constant 0 : i32
    return %arg0, %c0_i32 : i32, i32
  }
}

</mosaic_0001>

<llo_original>
// kernel: tpu_custom_call.1
$region0: #{tpu_custom_call.1}
  #allocation0 [shape = 'u32[]', space=smem, size = 0x4, offset = 0x4, fixed_abs, tag = 'smem constant byte address 0x4 - core index']
  #allocation1 [shape = 'u32[144,128]{1,0:T(1,128)}', space=vmem, size = 0x12000, scoped, tag = 'internal scratch']
  %s0 = inlined_call_operand.hbm [shape: bf16[8,256], index: 0, kind: input, shape index: {}]
  %s1 = inlined_call_operand.hbm [shape: bf16[256,128], index: 1, kind: input, shape index: {}]
  %s2 = inlined_call_operand.vmem [shape: f32[1,128], index: 2, kind: input, shape index: {}]
  %s3 = inlined_call_operand.hbm [shape: f32[8,128], index: 3, kind: output, shape index: {}]
  %s4 = sld [smem:[#allocation0]]
  $region30: #{tpu_custom_call.1} parent=0
    _
  %s6 = ssub.s32 1, %s4
  %s7 = scalar_select 0, %s6, %s4
  $region1: #{tpu_custom_call.1} parent=0
    #allocation2 [shape = 'u8[4096]{0}', space=vmem, size = 0x1000, scoped, tag = 'input window, operand 0, single buffered']
    #allocation3 [shape = 's32[1]{0}', space=sflag, size = 0x4, scoped, tag = 'scoped memory for tpu_custom_call.1']
    #allocation4 [shape = 's32[1]{0}', space=sflag, size = 0x4, scoped, tag = 'scoped memory for tpu_custom_call.1']
    #allocation5 [shape = 'u8[65536]{0}', space=vmem, size = 0x10000, scoped, tag = 'input window, operand 1, single buffered']
    #allocation6 [shape = 's32[1]{0}', space=sflag, size = 0x4, scoped, tag = 'scoped memory for tpu_custom_call.1']
    #allocation7 [shape = 'u8[4096]{0}', space=vmem, size = 0x1000, scoped, tag = 'output window, operand 0, single buffered']
    %8 = vsyncpa [#allocation3], 0
    %9 = vsyncpa [#allocation6], 0
    %10 = vsyncpa [#allocation4], 0
    // Predicated region
    $region2: #{tpu_custom_call.1} parent=1 // pred_check
      _
    $region3: #{tpu_custom_call.1} parent=1 // pred_check_branch
      %12 = sbr.rel (0) target = $region5
    $region4: #{tpu_custom_call.1} parent=1 // pred_region
      %s14 = ssub.s32 128, 128
      %15 = vsyncadd [#allocation3], %s14
      %s17 = sshll.u32 [#allocation2], 4
      %s18 = int_to_ptr.vmem [resolvable:$true] %s17
      %20 = dma.hbm_to_vmem [thread:$0]  %s0, 128, %s18, [#allocation3]
    $region5: #{tpu_custom_call.1} parent=1 // pred_fallthru
      _
    // Predicated region
    $region6: #{tpu_custom_call.1} parent=1 // pred_check
      _
    $region7: #{tpu_custom_call.1} parent=1 // pred_check_branch
      %22 = sbr.rel (0) target = $region9
    $region8: #{tpu_custom_call.1} parent=1 // pred_region
      %s24 = ssub.s32 2048, 2048
      %25 = vsyncadd [#allocation6], %s24
      %s26 = sshll.u32 [#allocation5], 4
      %s27 = int_to_ptr.vmem [resolvable:$true] %s26
      %32 = dma.hbm_to_vmem [thread:$0]  %s1, 2048, %s27, [#allocation6], 64, 64, 4
    $region9: #{tpu_custom_call.1} parent=1 // pred_fallthru
      _
    // Predicated region
    $region10: #{tpu_custom_call.1} parent=1 // pred_check
      _
    $region11: #{tpu_custom_call.1} parent=1 // pred_check_branch
      %34 = sbr.rel (0) target = $region13
    $region12: #{tpu_custom_call.1} parent=1 // pred_region
      _
    $region13: #{tpu_custom_call.1} parent=1 // pred_fallthru
      _
    // Predicated region
    $region14: #{tpu_custom_call.1} parent=1 // pred_check
      _
    $region15: #{tpu_custom_call.1} parent=1 // pred_check_branch
      %36 = sbr.rel (0) target = $region17
    $region16: #{tpu_custom_call.1} parent=1 // pred_region
      %37 = dma.done [#allocation3], 128
    $region17: #{tpu_custom_call.1} parent=1 // pred_fallthru
      _
    // Predicated region
    $region18: #{tpu_custom_call.1} parent=1 // pred_check
      _
    $region19: #{tpu_custom_call.1} parent=1 // pred_check_branch
      %39 = sbr.rel (0) target = $region21
    $region20: #{tpu_custom_call.1} parent=1 // pred_region
      %40 = dma.done [#allocation6], 2048
    $region21: #{tpu_custom_call.1} parent=1 // pred_fallthru
      _
    %v42 = vld [vmem:[#allocation2] sm:$0xff]
    %v43 = vld [vmem:[#allocation5] sm:$0xf]
    %v44 = vld [vmem:[#allocation5 + $0x4] sm:$0xf]
    %v45 = vld [vmem:[#allocation5 + $0x8] sm:$0xf]
    %v46 = vld [vmem:[#allocation5 + $0xc] sm:$0xf]
    %v47 = vld [vmem:[#allocation5 + $0x10] sm:$0xf]
    %v48 = vld [vmem:[#allocation5 + $0x14] sm:$0xf]
    %v49 = vld [vmem:[#allocation5 + $0x18] sm:$0xf]
    %v50 = vld [vmem:[#allocation5 + $0x1c] sm:$0xf]
    %v51 = vld [vmem:[#allocation5 + $0x20] sm:$0xf]
    %v52 = vld [vmem:[#allocation5 + $0x24] sm:$0xf]
    %v53 = vld [vmem:[#allocation5 + $0x28] sm:$0xf]
    %v54 = vld [vmem:[#allocation5 + $0x2c] sm:$0xf]
    %v55 = vld [vmem:[#allocation5 + $0x30] sm:$0xf]
    %v56 = vld [vmem:[#allocation5 + $0x34] sm:$0xf]
    %v57 = vld [vmem:[#allocation5 + $0x38] sm:$0xf]
    %v58 = vld [vmem:[#allocation5 + $0x3c] sm:$0xf]
    %v59 = vld [vmem:[#allocation5 + $0x40] sm:$0xf]
    %v60 = vld [vmem:[#allocation5 + $0x44] sm:$0xf]
    %v61 = vld [vmem:[#allocation5 + $0x48] sm:$0xf]
    %v62 = vld [vmem:[#allocation5 + $0x4c] sm:$0xf]
    %v63 = vld [vmem:[#allocation5 + $0x50] sm:$0xf]
    %v64 = vld [vmem:[#allocation5 + $0x54] sm:$0xf]
    %v65 = vld [vmem:[#allocation5 + $0x58] sm:$0xf]
    %v66 = vld [vmem:[#allocation5 + $0x5c] sm:$0xf]
    %v67 = vld [vmem:[#allocation5 + $0x60] sm:$0xf]
    %v68 = vld [vmem:[#allocation5 + $0x64] sm:$0xf]
    %v69 = vld [vmem:[#allocation5 + $0x68] sm:$0xf]
    %v70 = vld [vmem:[#allocation5 + $0x6c] sm:$0xf]
    %v71 = vld [vmem:[#allocation5 + $0x70] sm:$0xf]
    %v72 = vld [vmem:[#allocation5 + $0x74] sm:$0xf]
    %v73 = vld [vmem:[#allocation5 + $0x78] sm:$0xf]
    %v74 = vld [vmem:[#allocation5 + $0x7c] sm:$0xf]
    %v75 = vld [vmem:[%s2] sm:$0x1]
    %v77 = vlaneseq
    %v78 = vshrl.u32 %v77, 7
    %v79 = vsub.s32 0, %v78
    %v80 = vrot.slane %v75, %v79
    %v83 = vunpack.c.l.b16 %v42
    %v84 = vunpack.c.h.b16 %v42
    %v85 = vpack.c.b16 %v83, %v83
    %v86 = vpack.c.b16 %v84, %v84
    %v121 = vunpack.c.l.b16 %v43
    %v122 = vunpack.c.l.b16 %v44
    %v123 = vunpack.c.l.b16 %v45
    %v124 = vunpack.c.l.b16 %v46
    %v125 = vunpack.c.l.b16 %v47
    %v126 = vunpack.c.l.b16 %v48
    %v127 = vunpack.c.l.b16 %v49
    %v128 = vunpack.c.l.b16 %v50
    %v129 = vunpack.c.l.b16 %v51
    %v130 = vunpack.c.l.b16 %v52
    %v131 = vunpack.c.l.b16 %v53
    %v132 = vunpack.c.l.b16 %v54
    %v133 = vunpack.c.l.b16 %v55
    %v134 = vunpack.c.l.b16 %v56
    %v135 = vunpack.c.l.b16 %v57
    %v136 = vunpack.c.l.b16 %v58
    %v137 = vunpack.c.l.b16 %v59
    %v138 = vunpack.c.l.b16 %v60
    %v139 = vunpack.c.l.b16 %v61
    %v140 = vunpack.c.l.b16 %v62
    %v141 = vunpack.c.l.b16 %v63
    %v142 = vunpack.c.l.b16 %v64
    %v143 = vunpack.c.l.b16 %v65
    %v144 = vunpack.c.l.b16 %v66
    %v145 = vunpack.c.l.b16 %v67
    %v146 = vunpack.c.l.b16 %v68
    %v147 = vunpack.c.l.b16 %v69
    %v148 = vunpack.c.l.b16 %v70
    %v149 = vunpack.c.l.b16 %v71
    %v150 = vunpack.c.l.b16 %v72
    %v151 = vunpack.c.l.b16 %v73
    %v152 = vunpack.c.l.b16 %v74
    %v153 = vpack.c.b16 %v122, %v121
    %v154 = vpack.c.b16 %v124, %v123
    %v155 = vpack.c.b16 %v126, %v125
    %v156 = vpack.c.b16 %v128, %v127
    %v157 = vpack.c.b16 %v130, %v129
    %v158 = vpack.c.b16 %v132, %v131
    %v159 = vpack.c.b16 %v134, %v133
    %v160 = vpack.c.b16 %v136, %v135
    %v161 = vpack.c.b16 %v138, %v137
    %v162 = vpack.c.b16 %v140, %v139
    %v163 = vpack.c.b16 %v142, %v141
    %v164 = vpack.c.b16 %v144, %v143
    %v165 = vpack.c.b16 %v146, %v145
    %v166 = vpack.c.b16 %v148, %v147
    %v167 = vpack.c.b16 %v150, %v149
    %v168 = vpack.c.b16 %v152, %v151
    %185 = vmatprep.subr.bf16.mxu0 0
    %186 = vmatpush1.bf16.msra.mxu0 %v160
    %187 = vmatprep.subr.bf16.mxu0 0
    %188 = vmatpush1.bf16.msra.mxu0 %v159
    %189 = vmatprep.subr.bf16.mxu0 0
    %190 = vmatpush1.bf16.msra.mxu0 %v158
    %191 = vmatprep.subr.bf16.mxu0 0
    %192 = vmatpush1.bf16.msra.mxu0 %v157
    %193 = vmatprep.subr.bf16.mxu0 0
    %194 = vmatpush1.bf16.msra.mxu0 %v156
    %195 = vmatprep.subr.bf16.mxu0 0
    %196 = vmatpush1.bf16.msra.mxu0 %v155
    %197 = vmatprep.subr.bf16.mxu0 0
    %198 = vmatpush1.bf16.msra.mxu0 %v154
    %199 = vmatprep.subr.bf16.mxu0 0
    %200 = vmatpush1.bf16.msra.mxu0 %v153
    %201 = vmatprep.subr.bf16.mxu0 0
    %202 = vmatpush2.bf16.msra.mxu0 %v168
    %203 = vmatprep.subr.bf16.mxu0 0
    %204 = vmatpush2.bf16.msra.mxu0 %v167
    %205 = vmatprep.subr.bf16.mxu0 0
    %206 = vmatpush2.bf16.msra.mxu0 %v166
    %207 = vmatprep.subr.bf16.mxu0 0
    %208 = vmatpush2.bf16.msra.mxu0 %v165
    %209 = vmatprep.subr.bf16.mxu0 0
    %210 = vmatpush2.bf16.msra.mxu0 %v164
    %211 = vmatprep.subr.bf16.mxu0 0
    %212 = vmatpush2.bf16.msra.mxu0 %v163
    %213 = vmatprep.subr.bf16.mxu0 0
    %214 = vmatpush2.bf16.msra.mxu0 %v162
    %215 = vmatprep.subr.bf16.mxu0 0
    %216 = vmatpush2.bf16.msra.mxu0 %v161
    %217 = vmatprep.mubr.bf16.mxu0 %v86
    %218 = vmatmul.mubr.bf16.gmra.mxu0 %v85
    %v219 = vpop.f32.mrf.mxu0
    %v220 = vadd.f32 %v80, %v219
    %v221 = vpop.f32.mrf.mxu0
    %v222 = vpop.f32.mrf.mxu0
    %v223 = vpop.f32.mrf.mxu0
    %224 = vdwg.mxu0
    %225 = vst [vmem:[#allocation7] sm:$0xff] %v220
    // Predicated region
    $region22: #{tpu_custom_call.1} parent=1 // pred_check
      _
    $region23: #{tpu_custom_call.1} parent=1 // pred_check_branch
      %227 = sbr.rel (0) target = $region25
    $region24: #{tpu_custom_call.1} parent=1 // pred_region
      %s229 = ssub.s32 128, 128
      %230 = vsyncadd [#allocation4], %s229
      %s232 = sshll.u32 [#allocation7], 4
      %s233 = int_to_ptr.vmem [resolvable:$true] %s232
      %235 = dma.vmem_to_hbm [thread:$0]  %s233, 128, %s3, [#allocation4]
    $region25: #{tpu_custom_call.1} parent=1 // pred_fallthru
      _
    // Predicated region
    $region26: #{tpu_custom_call.1} parent=1 // pred_check
      _
    $region27: #{tpu_custom_call.1} parent=1 // pred_check_branch
      %237 = sbr.rel (0) target = $region29
    $region28: #{tpu_custom_call.1} parent=1 // pred_region
      %238 = dma.done [#allocation4], 128
    $region29: #{tpu_custom_call.1} parent=1 // pred_fallthru
      _
    %239 = vsyncpa [#allocation3], 1
    %240 = vsyncpa [#allocation6], 1
    %241 = vsyncpa [#allocation4], 1

</llo_original>
